<compile_context>
chip_gen: v7x
topology: tpu7x:2x2x1
jax: 0.10.0
libtpu: 0.0.40
codegen_flags: <defaults>
</compile_context>

<pallas_src>
import functools

import jax
import jax.numpy as jnp
from jax import lax
from jax.experimental import pallas as pl
from jax.experimental.pallas import tpu as pltpu

_LANE = 128
_SUBLANE = 8


def _round_up(x, m):
    return (x + m - 1) // m * m


def _vmem_budgets():
    """(tile-sizing budget, scoped vmem_limit_bytes), generation aware."""
    try:
        phys = int(getattr(pltpu.get_tpu_info(), "vmem_capacity_bytes", 64 << 20))
    except Exception:  # fall back to the smallest (v7x) VMEM
        phys = 64 << 20
    budget = phys // 2                                # ~32 MiB v7x, ~64 MiB v5e/v6e
    limit = min(int(phys * 0.70), phys - (8 << 20))   # leave headroom for Mosaic
    return budget, max(limit, 32 << 20)


def _pick_tile_n(n, d, lp, *, ce, budget, out_itemsize=4):
    """Largest row tile (multiple of 8, <=1024) whose VMEM footprint fits."""
    tile = min(1024, _round_up(max(n, _SUBLANE), _SUBLANE))
    resident = 2 * (d * lp + lp) * 4                  # double-buffered weight + bias

    def est(t):
        x_tile = t * d * 4                            # streamed f32 input tile
        slab = t * lp * 4                             # in-kernel f32 logits
        if ce:
            stream = x_tile + 2 * t * _LANE * 4       # labels in + NLL out (lane-padded)
        else:
            stream = x_tile + t * lp * out_itemsize   # logits slab written to HBM
        return 2 * stream + slab + resident

    while tile > _SUBLANE and est(tile) > budget:
        tile //= 2
    return max(_SUBLANE, _round_up(tile, _SUBLANE))


# ----------------------------- kernels -------------------------------------


def _linear_kernel(x_ref, wt_ref, b_ref, o_ref, *, compute_dtype):
    # x_ref: (tile_n, D); wt_ref: (D, Lp) resident; b_ref: (1, Lp) f32.
    x = x_ref[...].astype(compute_dtype)
    acc = jnp.dot(x, wt_ref[...], preferred_element_type=jnp.float32)
    o_ref[...] = (acc + b_ref[...]).astype(o_ref.dtype)


def _linear_ce_kernel(x_ref, wt_ref, b_ref, lab_ref, nll_ref, *, compute_dtype):
    # Fused Linear + per-row NLL. Padded label columns carry a -1e30 bias, so
    # no in-kernel masking is needed; logits never round-trip through HBM.
    x = x_ref[...].astype(compute_dtype)
    logits = jnp.dot(x, wt_ref[...], preferred_element_type=jnp.float32)
    logits = logits + b_ref[...]                        # (tile_n, Lp) f32
    tn, lp = logits.shape

    # Numerically stable log-sum-exp over the lane axis (XLU reduce + EUP exp).
    m = jnp.max(logits, axis=-1, keepdims=True)
    lse = m + jnp.log(jnp.sum(jnp.exp(logits - m), axis=-1, keepdims=True))

    # Gather the label logit via one-hot (no dynamic gather on TPU).
    col = lax.broadcasted_iota(jnp.int32, (tn, lp), 1)
    onehot = (col == lab_ref[...]).astype(jnp.float32)  # labels: (tile_n, 1) int32
    picked = jnp.sum(onehot * logits, axis=-1, keepdims=True)

    nll_ref[...] = lse - picked                         # (tile_n, 1) per-row NLL


# ----------------------------- wrapper --------------------------------------


def simple_fc_forward(x, weight, bias, labels=None, *,
                      compute_dtype=jnp.bfloat16, tile_n=None):
    """Pallas port of SimpleFC.forward.

    x:      (..., embedding_dim) float32
    weight: (num_labels, embedding_dim)   -- PyTorch nn.Linear convention
    bias:   (num_labels,)
    labels: optional int array broadcast-compatible with x.shape[:-1]
    compute_dtype: dtype fed to the MXU (accumulation is always f32;
                   pass jnp.float32 for exact nn.Linear/CrossEntropy parity).
    """
    embedding_dim = x.shape[-1]
    num_labels = weight.shape[0]
    lead = x.shape[:-1]
    x2 = x.reshape(-1, embedding_dim)
    n = x2.shape[0]
    is_ce = labels is not None

    # Lane-dense label axis: 128 for small heads, 256-aligned for large heads
    # (v6e/v7x MXUs are 256 wide; 128 already saturates v5e's 128x128 MXU).
    lp = _LANE if num_labels <= _LANE else _round_up(num_labels, 2 * _LANE)

    budget, vmem_limit = _vmem_budgets()
    if tile_n is None:
        tile_n = _pick_tile_n(n, embedding_dim, lp, ce=is_ce, budget=budget,
                              out_itemsize=jnp.dtype(compute_dtype).itemsize)
    n_pad = _round_up(max(n, tile_n), tile_n)
    grid = (n_pad // tile_n,)

    if n_pad != n:
        x2 = jnp.pad(x2, ((0, n_pad - n), (0, 0)))

    # One-time transpose to (D, Lp): kernels run a canonical (M,K)x(K,N) matmul.
    wt = weight.astype(compute_dtype).T
    if lp != num_labels:
        wt = jnp.pad(wt, ((0, 0), (0, lp - num_labels)))
    b = bias.astype(jnp.float32)
    if lp != num_labels:
        # CE path: -1e30 on padded columns so exp() underflows (no in-kernel mask).
        # Logits path: zero padding (padded columns are sliced off anyway).
        b = jnp.pad(b, (0, lp - num_labels),
                    constant_values=(-1e30 if is_ce else 0.0))
    b = b.reshape(1, lp)

    x_spec = pl.BlockSpec((tile_n, embedding_dim), lambda i: (i, 0))
    w_spec = pl.BlockSpec((embedding_dim, lp), lambda i: (0, 0))   # VMEM-resident
    b_spec = pl.BlockSpec((1, lp), lambda i: (0, 0))               # VMEM-resident
    cparams = pltpu.CompilerParams(
        dimension_semantics=("parallel",), vmem_limit_bytes=vmem_limit)

    if not is_ce:
        kernel = functools.partial(_linear_kernel, compute_dtype=compute_dtype)
        out = pl.pallas_call(
            kernel,
            out_shape=jax.ShapeDtypeStruct((n_pad, lp), compute_dtype),
            grid=grid,
            in_specs=[x_spec, w_spec, b_spec],
            out_specs=pl.BlockSpec((tile_n, lp), lambda i: (i, 0)),
            compiler_params=cparams,
        )(x2, wt, b)
        if n_pad != n or lp != num_labels:
            out = out[:n, :num_labels]
        return out.astype(x.dtype).reshape(lead + (num_labels,))

    # TODO(synk): PyTorch CrossEntropyLoss raises on out-of-range labels; here
    # an invalid label silently yields picked=0 (loss = logsumexp for that row).
    labels2 = labels.reshape(-1, 1).astype(jnp.int32)
    if n_pad != n:
        labels2 = jnp.pad(labels2, ((0, n_pad - n), (0, 0)))

    kernel = functools.partial(_linear_ce_kernel, compute_dtype=compute_dtype)
    nll = pl.pallas_call(
        kernel,
        out_shape=jax.ShapeDtypeStruct((n_pad, 1), jnp.float32),
        grid=grid,
        in_specs=[x_spec, w_spec, b_spec,
                  pl.BlockSpec((tile_n, 1), lambda i: (i, 0))],
        out_specs=pl.BlockSpec((tile_n, 1), lambda i: (i, 0)),
        compiler_params=cparams,
    )(x2, wt, b, labels2)
    # Tiny (N,) XLA reduction finishes the mean; keeping the grid fully parallel
    # lets both v7x TensorCores share the heavy fused matmul + LSE work.
    return jnp.sum(nll[:n, 0]) * jnp.float32(1.0 / n)


# ----------------------------- main ------------------------------------------

if __name__ == "__main__":
    batch, seq, embedding_dim, num_labels = 2, 8, 32, 16

    key = jax.random.PRNGKey(0)
    kx, kw, kb, kl = jax.random.split(key, 4)

    # Deterministic param init mimicking nn.Linear: U(-1/sqrt(D), 1/sqrt(D))
    bound = 1.0 / (embedding_dim ** 0.5)
    weight = jax.random.uniform(kw, (num_labels, embedding_dim),
                                jnp.float32, -bound, bound)
    bias = jax.random.uniform(kb, (num_labels,), jnp.float32, -bound, bound)

    x = jax.random.normal(kx, (batch, seq, embedding_dim), jnp.float32)
    labels = jax.random.randint(kl, (batch, seq), 0, num_labels, jnp.int32)

    # Pure-JAX f32 reference
    ref_logits = x @ weight.T + bias
    flat = ref_logits.reshape(-1, num_labels)
    ref_lse = jax.nn.logsumexp(flat, axis=-1)
    ref_pick = jnp.take_along_axis(flat, labels.reshape(-1, 1), axis=-1)[:, 0]
    ref_loss = jnp.mean(ref_lse - ref_pick)

    # Strict f32 path (exact nn.Linear / CrossEntropyLoss semantics)
    logits_f32 = jax.block_until_ready(
        simple_fc_forward(x, weight, bias, compute_dtype=jnp.float32))
    loss_f32 = jax.block_until_ready(
        simple_fc_forward(x, weight, bias, labels=labels,
                          compute_dtype=jnp.float32))
    assert logits_f32.shape == (batch, seq, num_labels)
    assert jnp.allclose(logits_f32, ref_logits, atol=1e-5, rtol=1e-5)
    assert jnp.allclose(loss_f32, ref_loss, atol=1e-5, rtol=1e-5)

    # Default perf path: bf16 into the MXU, f32 accumulation (relaxed tolerance)
    logits_bf = jax.block_until_ready(simple_fc_forward(x, weight, bias))
    loss_bf = jax.block_until_ready(
        simple_fc_forward(x, weight, bias, labels=labels))
    assert logits_bf.shape == (batch, seq, num_labels)
    assert logits_bf.dtype == x.dtype
    assert jnp.allclose(logits_bf, ref_logits, atol=5e-2, rtol=5e-2)
    assert jnp.allclose(loss_bf, ref_loss, atol=5e-2, rtol=5e-2)

    print("KERNEL_OK")
</pallas_src>

<mosaic_0001>
module attributes {stable_mosaic.version = 11 : i64} {
  func.func @_linear_kernel(%arg0: i32, %arg1: memref<16x32xf32, #tpu.memory_space<vmem>>, %arg2: memref<32x128xf32, #tpu.memory_space<vmem>>, %arg3: memref<1x128xf32, #tpu.memory_space<vmem>>, %arg4: memref<16x128xf32, #tpu.memory_space<vmem>>) attributes {dimension_semantics = [#tpu.dimension_semantics<parallel>], iteration_bounds = array<i64: 1>, scalar_prefetch = 0 : i64, scratch_operands = 0 : i64, tpu.core_type = #tpu.core_type<tc>, window_params = [{transform_indices = @transform_0, window_bounds = array<i64: 16, 32>}, {pipeline_mode = #tpu.pipeline_mode<synchronous>, transform_indices = @transform_1, window_bounds = array<i64: 32, 128>}, {pipeline_mode = #tpu.pipeline_mode<synchronous>, transform_indices = @transform_2, window_bounds = array<i64: 1, 128>}, {transform_indices = @transform_3, window_bounds = array<i64: 16, 128>}]} {
    %c0 = arith.constant 0 : index
    %c0_0 = arith.constant 0 : index
    %0 = vector.load %arg1[%c0, %c0_0] : memref<16x32xf32, #tpu.memory_space<vmem>>, vector<16x32xf32>
    %c0_1 = arith.constant 0 : index
    %c0_2 = arith.constant 0 : index
    %1 = vector.load %arg2[%c0_1, %c0_2] : memref<32x128xf32, #tpu.memory_space<vmem>>, vector<32x128xf32>
    %cst = arith.constant dense<0.000000e+00> : vector<16x128xf32>
    %2 = tpu.matmul %0, %1, %cst {dimension_numbers = #tpu.dot_dimension_numbers<[1], [0], [0], [1], [0, 0, 1, 1], [], []>} : vector<16x32xf32>, vector<32x128xf32>, vector<16x128xf32> -> vector<16x128xf32>
    %c0_3 = arith.constant 0 : index
    %c0_4 = arith.constant 0 : index
    %3 = vector.load %arg3[%c0_3, %c0_4] : memref<1x128xf32, #tpu.memory_space<vmem>>, vector<1x128xf32>
    %4 = vector.broadcast %3 : vector<1x128xf32> to vector<16x128xf32>
    %5 = arith.addf %2, %4 : vector<16x128xf32>
    %c0_5 = arith.constant 0 : index
    %c0_6 = arith.constant 0 : index
    %6 = vector.load %arg4[%c0_5, %c0_6] : memref<16x128xf32, #tpu.memory_space<vmem>>, vector<16x128xf32>
    tpu.vector_store %arg4[%c0_5, %c0_6], %5 {strides = array<i32>} : memref<16x128xf32, #tpu.memory_space<vmem>>, vector<16x128xf32>,
    return
  }
  func.func @transform_0(%arg0: i32) -> (i32, i32) {
    %c0_i32 = arith.constant 0 : i32
    %c0_i32_0 = arith.constant 0 : i32
    return %arg0, %c0_i32 : i32, i32
  }
  func.func @transform_1(%arg0: i32) -> (i32, i32) {
    %c0_i32 = arith.constant 0 : i32
    %c0_i32_0 = arith.constant 0 : i32
    %c0_i32_1 = arith.constant 0 : i32
    return %c0_i32, %c0_i32_0 : i32, i32
  }
  func.func @transform_2(%arg0: i32) -> (i32, i32) {
    %c0_i32 = arith.constant 0 : i32
    %c0_i32_0 = arith.constant 0 : i32
    %c0_i32_1 = arith.constant 0 : i32
    return %c0_i32, %c0_i32_0 : i32, i32
  }
  func.func @transform_3(%arg0: i32) -> (i32, i32) {
    %c0_i32 = arith.constant 0 : i32
    %c0_i32_0 = arith.constant 0 : i32
    return %arg0, %c0_i32 : i32, i32
  }
}

</mosaic_0001>

<llo_original>
// kernel: tpu_custom_call.1
$region0: #{tpu_custom_call.1}
  #allocation0 [shape = 'u32[]', space=smem, size = 0x4, offset = 0x4, fixed_abs, tag = 'smem constant byte address 0x4 - core index']
  #allocation1 [shape = 'u32[144,128]{1,0:T(1,128)}', space=vmem, size = 0x12000, scoped, tag = 'internal scratch']
  %s0 = inlined_call_operand.hbm [shape: f32[16,32], index: 0, kind: input, shape index: {}]
  %s1 = inlined_call_operand.hbm [shape: f32[32,128], index: 1, kind: input, shape index: {}]
  %s2 = inlined_call_operand.vmem [shape: f32[1,128], index: 2, kind: input, shape index: {}]
  %s3 = inlined_call_operand.hbm [shape: f32[16,128], index: 3, kind: output, shape index: {}]
  %s4 = sld [smem:[#allocation0]]
  $region30: #{tpu_custom_call.1} parent=0
    _
  %s6 = ssub.s32 1, %s4
  %s7 = scalar_select 0, %s6, %s4
  $region1: #{tpu_custom_call.1} parent=0
    #allocation2 [shape = 'u8[8192]{0}', space=vmem, size = 0x2000, scoped, tag = 'input window, operand 0, single buffered']
    #allocation3 [shape = 's32[1]{0}', space=sflag, size = 0x4, scoped, tag = 'scoped memory for tpu_custom_call.1']
    #allocation4 [shape = 's32[1]{0}', space=sflag, size = 0x4, scoped, tag = 'scoped memory for tpu_custom_call.1']
    #allocation5 [shape = 'u8[16384]{0}', space=vmem, size = 0x4000, scoped, tag = 'input window, operand 1, single buffered']
    #allocation6 [shape = 's32[1]{0}', space=sflag, size = 0x4, scoped, tag = 'scoped memory for tpu_custom_call.1']
    #allocation7 [shape = 'u8[8192]{0}', space=vmem, size = 0x2000, scoped, tag = 'output window, operand 0, single buffered']
    %8 = vsyncpa [#allocation3], 0
    %9 = vsyncpa [#allocation6], 0
    %10 = vsyncpa [#allocation4], 0
    // Predicated region
    $region2: #{tpu_custom_call.1} parent=1 // pred_check
      _
    $region3: #{tpu_custom_call.1} parent=1 // pred_check_branch
      %12 = sbr.rel (0) target = $region5
    $region4: #{tpu_custom_call.1} parent=1 // pred_region
      %s14 = ssub.s32 256, 256
      %15 = vsyncadd [#allocation3], %s14
      %s16 = sshll.u32 [#allocation2], 4
      %s17 = int_to_ptr.vmem [resolvable:$true] %s16
      %22 = dma.hbm_to_vmem [thread:$0]  %s0, 256, %s17, [#allocation3], 128, 128, 8
    $region5: #{tpu_custom_call.1} parent=1 // pred_fallthru
      _
    // Predicated region
    $region6: #{tpu_custom_call.1} parent=1 // pred_check
      _
    $region7: #{tpu_custom_call.1} parent=1 // pred_check_branch
      %24 = sbr.rel (0) target = $region9
    $region8: #{tpu_custom_call.1} parent=1 // pred_region
      %s26 = ssub.s32 512, 512
      %27 = vsyncadd [#allocation6], %s26
      %s28 = sshll.u32 [#allocation5], 4
      %s29 = int_to_ptr.vmem [resolvable:$true] %s28
      %34 = dma.hbm_to_vmem [thread:$0]  %s1, 512, %s29, [#allocation6], 128, 128, 8
    $region9: #{tpu_custom_call.1} parent=1 // pred_fallthru
      _
    // Predicated region
    $region10: #{tpu_custom_call.1} parent=1 // pred_check
      _
    $region11: #{tpu_custom_call.1} parent=1 // pred_check_branch
      %36 = sbr.rel (0) target = $region13
    $region12: #{tpu_custom_call.1} parent=1 // pred_region
      _
    $region13: #{tpu_custom_call.1} parent=1 // pred_fallthru
      _
    // Predicated region
    $region14: #{tpu_custom_call.1} parent=1 // pred_check
      _
    $region15: #{tpu_custom_call.1} parent=1 // pred_check_branch
      %38 = sbr.rel (0) target = $region17
    $region16: #{tpu_custom_call.1} parent=1 // pred_region
      %39 = dma.done [#allocation3], 256
    $region17: #{tpu_custom_call.1} parent=1 // pred_fallthru
      _
    // Predicated region
    $region18: #{tpu_custom_call.1} parent=1 // pred_check
      _
    $region19: #{tpu_custom_call.1} parent=1 // pred_check_branch
      %41 = sbr.rel (0) target = $region21
    $region20: #{tpu_custom_call.1} parent=1 // pred_region
      %42 = dma.done [#allocation6], 512
    $region21: #{tpu_custom_call.1} parent=1 // pred_fallthru
      _
    %v43 = vld [vmem:[#allocation2] sm:$0xff]
    %v44 = vld [vmem:[#allocation2 + $0x8] sm:$0xff]
    %v45 = vld [vmem:[#allocation5] sm:$0xff]
    %v46 = vld [vmem:[#allocation5 + $0x8] sm:$0xff]
    %v47 = vld [vmem:[#allocation5 + $0x10] sm:$0xff]
    %v48 = vld [vmem:[#allocation5 + $0x18] sm:$0xff]
    %v49 = vld [vmem:[%s2] sm:$0x1]
    %v51 = vlaneseq
    %v52 = vshrl.u32 %v51, 7
    %v53 = vsub.s32 0, %v52
    %v54 = vrot.slane %v49, %v53
    %vm56 = vcmask 261120
    %v58 = vsel %vm56, %v43, 0
    %v61 = vsel %vm56, %v44, 0
    %63 = vmatprep.subr.mxu0 0.0
    %64 = vmatpush1.msra.mxu0 %v45
    %65 = vmatprep.subr.mxu0 0.0
    %66 = vmatpush1.msra.mxu0 %v46
    %67 = vmatprep.subr.mxu0 0.0
    %68 = vmatpush1.msra.mxu0 %v47
    %69 = vmatprep.subr.mxu0 0.0
    %70 = vmatpush1.msra.mxu0 %v48
    %71 = vmatprep.subr.mxu0 0.0
    %72 = vmatpush1.msra.mxu0 0.0
    %73 = vmatprep.subr.mxu0 0.0
    %74 = vmatpush1.msra.mxu0 0.0
    %75 = vmatprep.subr.mxu0 0.0
    %76 = vmatpush1.msra.mxu0 0.0
    %77 = vmatprep.subr.mxu0 0.0
    %78 = vmatpush1.msra.mxu0 0.0
    %79 = vmatprep.subr.mxu0 0.0
    %80 = vmatpush1.msra.mxu0 0.0
    %81 = vmatprep.subr.mxu0 0.0
    %82 = vmatpush1.msra.mxu0 0.0
    %83 = vmatprep.subr.mxu0 0.0
    %84 = vmatpush1.msra.mxu0 0.0
    %85 = vmatprep.subr.mxu0 0.0
    %86 = vmatpush1.msra.mxu0 0.0
    %87 = vmatprep.subr.mxu0 0.0
    %88 = vmatpush1.msra.mxu0 0.0
    %89 = vmatprep.subr.mxu0 0.0
    %90 = vmatpush1.msra.mxu0 0.0
    %91 = vmatprep.subr.mxu0 0.0
    %92 = vmatpush1.msra.mxu0 0.0
    %93 = vmatprep.subr.mxu0 0.0
    %94 = vmatpush1.msra.mxu0 0.0
    %95 = vmatprep.subr.mxu0 0.0
    %96 = vmatpush1.msra.mxu0 0.0
    %97 = vmatprep.subr.mxu0 0.0
    %98 = vmatpush1.msra.mxu0 0.0
    %99 = vmatprep.subr.mxu0 0.0
    %100 = vmatpush1.msra.mxu0 0.0
    %101 = vmatprep.subr.mxu0 0.0
    %102 = vmatpush1.msra.mxu0 0.0
    %103 = vmatprep.subr.mxu0 0.0
    %104 = vmatpush1.msra.mxu0 0.0
    %105 = vmatprep.subr.mxu0 0.0
    %106 = vmatpush1.msra.mxu0 0.0
    %107 = vmatprep.subr.mxu0 0.0
    %108 = vmatpush1.msra.mxu0 0.0
    %109 = vmatprep.subr.mxu0 0.0
    %110 = vmatpush1.msra.mxu0 0.0
    %111 = vmatprep.subr.mxu0 0.0
    %112 = vmatpush1.msra.mxu0 0.0
    %113 = vmatprep.subr.mxu0 0.0
    %114 = vmatpush1.msra.mxu0 0.0
    %115 = vmatprep.subr.mxu0 0.0
    %116 = vmatpush1.msra.mxu0 0.0
    %117 = vmatprep.subr.mxu0 0.0
    %118 = vmatpush1.msra.mxu0 0.0
    %119 = vmatprep.subr.mxu0 0.0
    %120 = vmatpush1.msra.mxu0 0.0
    %121 = vmatprep.subr.mxu0 0.0
    %122 = vmatpush1.msra.mxu0 0.0
    %123 = vmatprep.subr.mxu0 0.0
    %124 = vmatpush1.msra.mxu0 0.0
    %125 = vmatprep.subr.mxu0 0.0
    %126 = vmatpush1.msra.mxu0 0.0
    %127 = vmatprep.mubr.f32.mxu0 0.0
    %128 = vmatmul.mubr.f32.gmra.mrb[0].mxu0 %v58
    %v129 = vpop.f32.mrb[0].mxu0
    %v130 = vadd.f32 %v54, %v129
    %v131 = vpop.f32.mrb[0].mxu0
    %132 = vmatprep.mubr.f32.mxu0 0.0
    %133 = vmatmul.mubr.f32.gmra.mrb[0].mxu0 %v61
    %v134 = vpop.f32.mrb[0].mxu0
    %v135 = vadd.f32 %v54, %v134
    %v136 = vpop.f32.mrb[0].mxu0
    %137 = vdwg.mxu0
    %138 = vst [vmem:[#allocation7] sm:$0xff] %v130
    %139 = vst [vmem:[#allocation7 + $0x8] sm:$0xff] %v135
    // Predicated region
    $region22: #{tpu_custom_call.1} parent=1 // pred_check
      _
    $region23: #{tpu_custom_call.1} parent=1 // pred_check_branch
      %141 = sbr.rel (0) target = $region25
    $region24: #{tpu_custom_call.1} parent=1 // pred_region
      %s143 = ssub.s32 256, 256
      %144 = vsyncadd [#allocation4], %s143
      %s145 = sshll.u32 [#allocation7], 4
      %s146 = int_to_ptr.vmem [resolvable:$true] %s145
      %151 = dma.vmem_to_hbm [thread:$0]  %s146, 256, %s3, [#allocation4], 128, 128, 8
    $region25: #{tpu_custom_call.1} parent=1 // pred_fallthru
      _
    // Predicated region
    $region26: #{tpu_custom_call.1} parent=1 // pred_check
      _
    $region27: #{tpu_custom_call.1} parent=1 // pred_check_branch
      %153 = sbr.rel (0) target = $region29
    $region28: #{tpu_custom_call.1} parent=1 // pred_region
      %154 = dma.done [#allocation4], 256
    $region29: #{tpu_custom_call.1} parent=1 // pred_fallthru
      _
    %155 = vsyncpa [#allocation3], 1
    %156 = vsyncpa [#allocation6], 1
    %157 = vsyncpa [#allocation4], 1

</llo_original>
